<compile_context>
chip_gen: v6e
topology: v6e:2x2x1
jax: 0.10.0
libtpu: 0.0.40
codegen_flags: <defaults>
</compile_context>

<pallas_src>
import jax
import jax.numpy as jnp
from jax.experimental import pallas as pl
from jax.experimental.pallas import tpu as pltpu


def _leaky_relu(h, slope=0.1):
    return jnp.where(h > 0, h, slope * h)


def disc_kernel(x_ref, w1_ref, b1_ref, w2_ref, b2_ref, w3_ref, b3_ref,
                w4_ref, b4_ref, o_ref):
    # x tile arrives in f32 and is cast to bf16 here (fold the convert into the
    # kernel instead of a separate XLA pass over x in HBM). Layers 1-3 hit the
    # MXU with bf16 operands and f32 accumulation; LeakyReLU / bias math is f32.
    x = x_ref[...].astype(jnp.bfloat16)
    h = jnp.dot(x, w1_ref[...], preferred_element_type=jnp.float32) + b1_ref[...]
    h = _leaky_relu(h)
    h = jnp.dot(h.astype(jnp.bfloat16), w2_ref[...],
                preferred_element_type=jnp.float32) + b2_ref[...]
    h = _leaky_relu(h)
    h = jnp.dot(h.astype(jnp.bfloat16), w3_ref[...],
                preferred_element_type=jnp.float32) + b3_ref[...]
    h = _leaky_relu(h)
    # Layer 4 (512 -> 1): N=1 would use 1/256 of the MXU, so do it on the VPU/XLU
    # instead, fully in f32 (w4 is a (1, 512) f32 row, b4 a (1, 1) f32 scalar).
    logit = jnp.sum(h * w4_ref[...], axis=-1, keepdims=True) + b4_ref[...]
    o_ref[...] = jax.nn.sigmoid(logit)


def _round_up(n, m):
    return ((n + m - 1) // m) * m


def _pick_tile_b(B, in_features):
    """Batch tile: large (1024-2048) and 256-aligned for big B, >=2 grid steps so
    both v7x TensorCores get work; small sublane-aligned single tile for tiny B."""
    if B <= 512:
        tile_b = _round_up(max(B, 1), 8)
    else:
        tile_b = min(2048, _round_up(pl.cdiv(B, 2), 256))

        def footprint(tb):
            x_tile = tb * in_features * 4 * 2           # f32 x tile, double-buffered
            acts_f32 = tb * (128 + 256 + 512) * 4       # f32 intermediates
            acts_bf16 = tb * (in_features + 128 + 256) * 2
            return x_tile + acts_f32 + acts_bf16

        # Keep the per-step footprint comfortably inside the scoped-VMEM budget.
        while tile_b > 256 and footprint(tile_b) > 24 * 1024 * 1024:
            tile_b = _round_up(tile_b // 2, 256)
    return tile_b


@jax.jit
def discriminator_forward(x, params):
    """x: (B, in_features) float32. Returns (B, 1) float32 probabilities."""
    w1, b1 = params["w1"], params["b1"]
    w2, b2 = params["w2"], params["b2"]
    w3, b3 = params["w3"], params["b3"]
    w4, b4 = params["w4"], params["b4"]
    B, in_features = x.shape

    tile_b = _pick_tile_b(B, in_features)
    b_padded = _round_up(B, tile_b)

    x_in = x
    if b_padded != B:
        x_in = jnp.pad(x_in, ((0, b_padded - B), (0, 0)))

    grid = (b_padded // tile_b,)

    def resident(shape):
        # Full-array block + constant index_map -> fetched once, VMEM-resident
        # across all batch tiles.
        return pl.BlockSpec(shape, lambda i: (0, 0))

    flops = 2 * b_padded * (in_features * 128 + 128 * 256 + 256 * 512 + 512 * 1)
    weight_bytes = sum(int(params[k].size) * params[k].dtype.itemsize for k in params)
    bytes_accessed = int(x_in.size) * 4 + weight_bytes + b_padded * 4

    out = pl.pallas_call(
        disc_kernel,
        out_shape=jax.ShapeDtypeStruct((b_padded, 1), jnp.float32),
        grid=grid,
        in_specs=[
            pl.BlockSpec((tile_b, in_features), lambda i: (i, 0)),  # streaming x tile
            resident(w1.shape), resident(b1.shape),
            resident(w2.shape), resident(b2.shape),
            resident(w3.shape), resident(b3.shape),
            resident(w4.shape), resident(b4.shape),
        ],
        out_specs=pl.BlockSpec((tile_b, 1), lambda i: (i, 0)),
        compiler_params=pltpu.CompilerParams(
            dimension_semantics=("parallel",),
            vmem_limit_bytes=48 * 1024 * 1024),
        cost_estimate=pl.CostEstimate(
            flops=flops, transcendentals=b_padded, bytes_accessed=bytes_accessed),
    )(x_in, w1, b1, w2, b2, w3, b3, w4, b4)

    return out[:B]


def init_params(key, in_features):
    """Deterministic synthetic parameters matching the PyTorch module's shapes (f32)."""
    ks = jax.random.split(key, 8)
    dims = [(in_features, 128), (128, 256), (256, 512), (512, 1)]
    params = {}
    for i, (din, dout) in enumerate(dims, start=1):
        bound = 1.0 / float(din) ** 0.5
        params[f"w{i}"] = jax.random.uniform(
            ks[2 * (i - 1)], (din, dout), jnp.float32, -bound, bound)
        params[f"b{i}"] = jax.random.uniform(
            ks[2 * (i - 1) + 1], (1, dout), jnp.float32, -bound, bound)
    return params


def prepare_params(params_f32):
    """One-time cast outside the hot path: w1-w3 -> bf16 MXU inputs, biases f32,
    w4 -> (1, 512) f32 row for the in-kernel VPU reduction."""
    prepped = {}
    for i in range(1, 4):
        prepped[f"w{i}"] = params_f32[f"w{i}"].astype(jnp.bfloat16)
        prepped[f"b{i}"] = params_f32[f"b{i}"].astype(jnp.float32)
    prepped["w4"] = params_f32["w4"].reshape(1, 512).astype(jnp.float32)
    prepped["b4"] = params_f32["b4"].astype(jnp.float32)
    return prepped


def reference_forward(x, params_f32, matmul_dtype=jnp.float32):
    """Pure-JAX reference. matmul_dtype=bf16 mirrors the kernel's MXU input
    precision for layers 1-3; layer 4 is always f32 (as in the kernel)."""
    h = x
    for i in range(1, 5):
        dt = matmul_dtype if i < 4 else jnp.float32
        w = params_f32[f"w{i}"].astype(dt)
        h = jnp.dot(h.astype(dt), w,
                    preferred_element_type=jnp.float32) + params_f32[f"b{i}"]
        if i < 4:
            h = jnp.where(h > 0, h, 0.1 * h)
    return jax.nn.sigmoid(h)


def _check(B, in_features, key):
    kx, kp = jax.random.split(key)
    x = jax.random.normal(kx, (B, in_features), jnp.float32)
    params_f32 = init_params(kp, in_features)
    params = prepare_params(params_f32)

    out = jax.block_until_ready(discriminator_forward(x, params))
    assert out.shape == (B, 1), out.shape

    # Matched-precision reference (bf16 matmul inputs for layers 1-3): tight check.
    ref_match = reference_forward(x, params_f32, matmul_dtype=jnp.bfloat16)
    err = float(jnp.max(jnp.abs(out - ref_match)))
    assert jnp.allclose(out, ref_match, atol=2e-3, rtol=2e-3), err

    # Full-f32 reference (exact PyTorch semantics): loose check (bf16 quantization
    # of layer-1..3 inputs only; layer 4 is now exact f32).
    ref_f32 = reference_forward(x, params_f32, matmul_dtype=jnp.float32)
    err32 = float(jnp.max(jnp.abs(out - ref_f32)))
    assert jnp.allclose(out, ref_f32, atol=5e-2, rtol=5e-2), err32


if __name__ == "__main__":
    key = jax.random.PRNGKey(0)
    k1, k2, k3 = jax.random.split(key, 3)
    # Small shape consistent with the module (single-tile path).
    _check(B=8, in_features=64, key=k1)
    # Single-tile path with batch padding (B not a multiple of 8).
    _check(B=300, in_features=64, key=k2)
    # Multi-step grid path (2 tiles, padded batch) exercising the big-B tiling.
    _check(B=1200, in_features=64, key=k3)
    print("KERNEL_OK")
</pallas_src>

<mosaic_0001>
module attributes {stable_mosaic.version = 11 : i64} {
  func.func @disc_kernel(%arg0: i32, %arg1: memref<8x64xf32, #tpu.memory_space<vmem>>, %arg2: memref<64x128xbf16, #tpu.memory_space<vmem>>, %arg3: memref<1x128xf32, #tpu.memory_space<vmem>>, %arg4: memref<128x256xbf16, #tpu.memory_space<vmem>>, %arg5: memref<1x256xf32, #tpu.memory_space<vmem>>, %arg6: memref<256x512xbf16, #tpu.memory_space<vmem>>, %arg7: memref<1x512xf32, #tpu.memory_space<vmem>>, %arg8: memref<1x512xf32, #tpu.memory_space<vmem>>, %arg9: memref<1x1xf32, #tpu.memory_space<vmem>>, %arg10: memref<8x1xf32, #tpu.memory_space<vmem>>) attributes {dimension_semantics = [#tpu.dimension_semantics<parallel>], iteration_bounds = array<i64: 1>, scalar_prefetch = 0 : i64, scratch_operands = 0 : i64, tpu.core_type = #tpu.core_type<tc>, window_params = [{transform_indices = @transform_0, window_bounds = array<i64: 8, 64>}, {pipeline_mode = #tpu.pipeline_mode<synchronous>, transform_indices = @transform_1, window_bounds = array<i64: 64, 128>}, {pipeline_mode = #tpu.pipeline_mode<synchronous>, transform_indices = @transform_2, window_bounds = array<i64: 1, 128>}, {pipeline_mode = #tpu.pipeline_mode<synchronous>, transform_indices = @transform_3, window_bounds = array<i64: 128, 256>}, {pipeline_mode = #tpu.pipeline_mode<synchronous>, transform_indices = @transform_4, window_bounds = array<i64: 1, 256>}, {pipeline_mode = #tpu.pipeline_mode<synchronous>, transform_indices = @transform_5, window_bounds = array<i64: 256, 512>}, {pipeline_mode = #tpu.pipeline_mode<synchronous>, transform_indices = @transform_6, window_bounds = array<i64: 1, 512>}, {pipeline_mode = #tpu.pipeline_mode<synchronous>, transform_indices = @transform_7, window_bounds = array<i64: 1, 512>}, {pipeline_mode = #tpu.pipeline_mode<synchronous>, transform_indices = @transform_8, window_bounds = array<i64: 1, 1>}, {transform_indices = @transform_9, window_bounds = array<i64: 8, 1>}]} {
    %c0 = arith.constant 0 : index
    %c0_0 = arith.constant 0 : index
    %0 = vector.load %arg1[%c0, %c0_0] : memref<8x64xf32, #tpu.memory_space<vmem>>, vector<8x64xf32>
    %1 = arith.truncf %0 : vector<8x64xf32> to vector<8x64xbf16>
    %c0_1 = arith.constant 0 : index
    %c0_2 = arith.constant 0 : index
    %2 = vector.load %arg2[%c0_1, %c0_2] : memref<64x128xbf16, #tpu.memory_space<vmem>>, vector<64x128xbf16>
    %cst = arith.constant dense<0.000000e+00> : vector<8x128xf32>
    %3 = tpu.matmul %1, %2, %cst {dimension_numbers = #tpu.dot_dimension_numbers<[1], [0], [0], [1], [0, 0, 1, 1], [], []>} : vector<8x64xbf16>, vector<64x128xbf16>, vector<8x128xf32> -> vector<8x128xf32>
    %c0_3 = arith.constant 0 : index
    %c0_4 = arith.constant 0 : index
    %4 = vector.load %arg3[%c0_3, %c0_4] : memref<1x128xf32, #tpu.memory_space<vmem>>, vector<1x128xf32>
    %5 = vector.broadcast %4 : vector<1x128xf32> to vector<8x128xf32>
    %6 = arith.addf %3, %5 : vector<8x128xf32>
    %cst_5 = arith.constant 0.000000e+00 : f32
    %7 = vector.broadcast %cst_5 : f32 to vector<8x128xf32>
    %8 = arith.cmpf ogt, %6, %7 : vector<8x128xf32>
    %cst_6 = arith.constant 1.000000e-01 : f32
    %9 = vector.broadcast %cst_6 : f32 to vector<8x128xf32>
    %10 = arith.mulf %9, %6 : vector<8x128xf32>
    %11 = arith.select %8, %6, %10 : vector<8x128xi1>, vector<8x128xf32>
    %12 = arith.truncf %11 : vector<8x128xf32> to vector<8x128xbf16>
    %c0_7 = arith.constant 0 : index
    %c0_8 = arith.constant 0 : index
    %13 = vector.load %arg4[%c0_7, %c0_8] : memref<128x256xbf16, #tpu.memory_space<vmem>>, vector<128x256xbf16>
    %cst_9 = arith.constant dense<0.000000e+00> : vector<8x256xf32>
    %14 = tpu.matmul %12, %13, %cst_9 {dimension_numbers = #tpu.dot_dimension_numbers<[1], [0], [0], [1], [0, 0, 1, 1], [], []>} : vector<8x128xbf16>, vector<128x256xbf16>, vector<8x256xf32> -> vector<8x256xf32>
    %c0_10 = arith.constant 0 : index
    %c0_11 = arith.constant 0 : index
    %15 = vector.load %arg5[%c0_10, %c0_11] : memref<1x256xf32, #tpu.memory_space<vmem>>, vector<1x256xf32>
    %16 = vector.broadcast %15 : vector<1x256xf32> to vector<8x256xf32>
    %17 = arith.addf %14, %16 : vector<8x256xf32>
    %cst_12 = arith.constant 0.000000e+00 : f32
    %18 = vector.broadcast %cst_12 : f32 to vector<8x256xf32>
    %19 = arith.cmpf ogt, %17, %18 : vector<8x256xf32>
    %cst_13 = arith.constant 1.000000e-01 : f32
    %20 = vector.broadcast %cst_13 : f32 to vector<8x256xf32>
    %21 = arith.mulf %20, %17 : vector<8x256xf32>
    %22 = arith.select %19, %17, %21 : vector<8x256xi1>, vector<8x256xf32>
    %23 = arith.truncf %22 : vector<8x256xf32> to vector<8x256xbf16>
    %c0_14 = arith.constant 0 : index
    %c0_15 = arith.constant 0 : index
    %24 = vector.load %arg6[%c0_14, %c0_15] : memref<256x512xbf16, #tpu.memory_space<vmem>>, vector<256x512xbf16>
    %cst_16 = arith.constant dense<0.000000e+00> : vector<8x512xf32>
    %25 = tpu.matmul %23, %24, %cst_16 {dimension_numbers = #tpu.dot_dimension_numbers<[1], [0], [0], [1], [0, 0, 1, 1], [], []>} : vector<8x256xbf16>, vector<256x512xbf16>, vector<8x512xf32> -> vector<8x512xf32>
    %c0_17 = arith.constant 0 : index
    %c0_18 = arith.constant 0 : index
    %26 = vector.load %arg7[%c0_17, %c0_18] : memref<1x512xf32, #tpu.memory_space<vmem>>, vector<1x512xf32>
    %27 = vector.broadcast %26 : vector<1x512xf32> to vector<8x512xf32>
    %28 = arith.addf %25, %27 : vector<8x512xf32>
    %cst_19 = arith.constant 0.000000e+00 : f32
    %29 = vector.broadcast %cst_19 : f32 to vector<8x512xf32>
    %30 = arith.cmpf ogt, %28, %29 : vector<8x512xf32>
    %cst_20 = arith.constant 1.000000e-01 : f32
    %31 = vector.broadcast %cst_20 : f32 to vector<8x512xf32>
    %32 = arith.mulf %31, %28 : vector<8x512xf32>
    %33 = arith.select %30, %28, %32 : vector<8x512xi1>, vector<8x512xf32>
    %c0_21 = arith.constant 0 : index
    %c0_22 = arith.constant 0 : index
    %34 = vector.load %arg8[%c0_21, %c0_22] : memref<1x512xf32, #tpu.memory_space<vmem>>, vector<1x512xf32>
    %35 = vector.broadcast %34 : vector<1x512xf32> to vector<8x512xf32>
    %36 = arith.mulf %33, %35 : vector<8x512xf32>
    %cst_23 = arith.constant dense<0.000000e+00> : vector<8xf32>
    %37 = vector.multi_reduction <add>, %36, %cst_23 [1] : vector<8x512xf32> to vector<8xf32>
    %38 = vector.shape_cast %37 : vector<8xf32> to vector<8x1xf32>
    %c0_24 = arith.constant 0 : index
    %c0_25 = arith.constant 0 : index
    %39 = vector.load %arg9[%c0_24, %c0_25] : memref<1x1xf32, #tpu.memory_space<vmem>>, vector<1x1xf32>
    %40 = vector.broadcast %39 : vector<1x1xf32> to vector<8x1xf32>
    %41 = arith.addf %38, %40 : vector<8x1xf32>
    %42 = arith.negf %41 : vector<8x1xf32>
    %43 = math.exp %42 : vector<8x1xf32>
    %cst_26 = arith.constant 1.000000e+00 : f32
    %44 = vector.broadcast %cst_26 : f32 to vector<8x1xf32>
    %45 = arith.addf %44, %43 : vector<8x1xf32>
    %46 = arith.divf %44, %45 : vector<8x1xf32>
    %c0_27 = arith.constant 0 : index
    %c0_28 = arith.constant 0 : index
    %47 = vector.load %arg10[%c0_27, %c0_28] : memref<8x1xf32, #tpu.memory_space<vmem>>, vector<8x1xf32>
    tpu.vector_store %arg10[%c0_27, %c0_28], %46 {strides = array<i32>} : memref<8x1xf32, #tpu.memory_space<vmem>>, vector<8x1xf32>,
    return
  }
  func.func @transform_0(%arg0: i32) -> (i32, i32) {
    %c0_i32 = arith.constant 0 : i32
    %c0_i32_0 = arith.constant 0 : i32
    return %arg0, %c0_i32 : i32, i32
  }
  func.func @transform_1(%arg0: i32) -> (i32, i32) {
    %c0_i32 = arith.constant 0 : i32
    %c0_i32_0 = arith.constant 0 : i32
    %c0_i32_1 = arith.constant 0 : i32
    return %c0_i32, %c0_i32_0 : i32, i32
  }
  func.func @transform_2(%arg0: i32) -> (i32, i32) {
    %c0_i32 = arith.constant 0 : i32
    %c0_i32_0 = arith.constant 0 : i32
    %c0_i32_1 = arith.constant 0 : i32
    return %c0_i32, %c0_i32_0 : i32, i32
  }
  func.func @transform_3(%arg0: i32) -> (i32, i32) {
    %c0_i32 = arith.constant 0 : i32
    %c0_i32_0 = arith.constant 0 : i32
    %c0_i32_1 = arith.constant 0 : i32
    return %c0_i32, %c0_i32_0 : i32, i32
  }
  func.func @transform_4(%arg0: i32) -> (i32, i32) {
    %c0_i32 = arith.constant 0 : i32
    %c0_i32_0 = arith.constant 0 : i32
    %c0_i32_1 = arith.constant 0 : i32
    return %c0_i32, %c0_i32_0 : i32, i32
  }
  func.func @transform_5(%arg0: i32) -> (i32, i32) {
    %c0_i32 = arith.constant 0 : i32
    %c0_i32_0 = arith.constant 0 : i32
    %c0_i32_1 = arith.constant 0 : i32
    return %c0_i32, %c0_i32_0 : i32, i32
  }
  func.func @transform_6(%arg0: i32) -> (i32, i32) {
    %c0_i32 = arith.constant 0 : i32
    %c0_i32_0 = arith.constant 0 : i32
    %c0_i32_1 = arith.constant 0 : i32
    return %c0_i32, %c0_i32_0 : i32, i32
  }
  func.func @transform_7(%arg0: i32) -> (i32, i32) {
    %c0_i32 = arith.constant 0 : i32
    %c0_i32_0 = arith.constant 0 : i32
    %c0_i32_1 = arith.constant 0 : i32
    return %c0_i32, %c0_i32_0 : i32, i32
  }
  func.func @transform_8(%arg0: i32) -> (i32, i32) {
    %c0_i32 = arith.constant 0 : i32
    %c0_i32_0 = arith.constant 0 : i32
    %c0_i32_1 = arith.constant 0 : i32
    return %c0_i32, %c0_i32_0 : i32, i32
  }
  func.func @transform_9(%arg0: i32) -> (i32, i32) {
    %c0_i32 = arith.constant 0 : i32
    %c0_i32_0 = arith.constant 0 : i32
    return %arg0, %c0_i32 : i32, i32
  }
}

</mosaic_0001>

<llo_original>
// kernel: discriminator_forward.1
$region0: #{discriminator_forward.1}
  #allocation0 [shape = 'u32[]', space=smem, size = 0x4, offset = 0x4, fixed_abs, tag = 'smem constant byte address 0x4 - core index']
  #allocation1 [shape = 'u32[144,128]{1,0:T(1,128)}', space=vmem, size = 0x12000, scoped, tag = 'internal scratch']
  #allocation2 [shape = 'f32[1,1]{1,0:T(1,128)S(1)}', space=vmem, size = 0x200, scoped, tag = 'scoped memory for discriminator_forward.1']
  %s0 = inlined_call_operand.hbm [shape: f32[8,64], index: 0, kind: input, shape index: {}]
  %s1 = inlined_call_operand.hbm [shape: bf16[64,128], index: 1, kind: input, shape index: {}]
  %s2 = inlined_call_operand.vmem [shape: f32[1,128], index: 2, kind: input, shape index: {}]
  %s3 = inlined_call_operand.hbm [shape: bf16[128,256], index: 3, kind: input, shape index: {}]
  %s4 = inlined_call_operand.hbm [shape: f32[1,256], index: 4, kind: input, shape index: {}]
  %s5 = inlined_call_operand.hbm [shape: bf16[256,512], index: 5, kind: input, shape index: {}]
  %s6 = inlined_call_operand.vmem [shape: f32[1,512], index: 6, kind: input, shape index: {}]
  %s7 = inlined_call_operand.vmem [shape: f32[1,512], index: 7, kind: input, shape index: {}]
  %s8 = inlined_call_operand.<no memory space> [shape: f32[1,1], index: 8, kind: input, shape index: {}]
  %s9 = inlined_call_operand.vmem [shape: f32[8,1], index: 9, kind: output, shape index: {}]
  %s10 = sld [smem:[#allocation0]]
  $region66: #{discriminator_forward.1} parent=0
    _
  %s12 = ssub.s32 1, %s10
  %s13 = scalar_select 0, %s12, %s10
  %v14 = vstv %s8
  %15 = vst [vmem:[#allocation2] sm:$0x1] %v14
  $region1: #{discriminator_forward.1} parent=0
    #allocation3 [shape = 'u8[4096]{0}', space=vmem, size = 0x1000, scoped, tag = 'input window, operand 0, single buffered']
    #allocation4 [shape = 's32[1]{0}', space=sflag, size = 0x4, scoped, tag = 'scoped memory for discriminator_forward.1']
    #allocation5 [shape = 'u8[16384]{0}', space=vmem, size = 0x4000, scoped, tag = 'input window, operand 1, single buffered']
    #allocation6 [shape = 's32[1]{0}', space=sflag, size = 0x4, scoped, tag = 'scoped memory for discriminator_forward.1']
    #allocation7 [shape = 'u8[65536]{0}', space=vmem, size = 0x10000, scoped, tag = 'input window, operand 3, single buffered']
    #allocation8 [shape = 'u8[1024]{0}', space=vmem, size = 0x400, scoped, tag = 'input window, operand 4, single buffered']
    #allocation9 [shape = 's32[1]{0}', space=sflag, size = 0x4, scoped, tag = 'scoped memory for discriminator_forward.1']
    #allocation10 [shape = 'u8[262144]{0}', space=vmem, size = 0x40000, scoped, tag = 'input window, operand 5, single buffered']
    %16 = vsyncpa [#allocation4], 0
    %17 = vsyncpa [#allocation6], 0
    %18 = vsyncpa [#allocation9], 0
    // Predicated region
    $region2: #{discriminator_forward.1} parent=1 // pred_check
      _
    $region3: #{discriminator_forward.1} parent=1 // pred_check_branch
      %20 = sbr.rel (0) target = $region5
    $region4: #{discriminator_forward.1} parent=1 // pred_region
      %s22 = ssub.s32 128, 128
      %23 = vsyncadd [#allocation4], %s22
      %s25 = sshll.u32 [#allocation3], 4
      %s26 = int_to_ptr.vmem [resolvable:$true] %s25
      %28 = dma.hbm_to_vmem [thread:$0]  %s0, 128, %s26, [#allocation4]
    $region5: #{discriminator_forward.1} parent=1 // pred_fallthru
      _
    // Predicated region
    $region6: #{discriminator_forward.1} parent=1 // pred_check
      _
    $region7: #{discriminator_forward.1} parent=1 // pred_check_branch
      %30 = sbr.rel (0) target = $region9
    $region8: #{discriminator_forward.1} parent=1 // pred_region
      %s32 = ssub.s32 512, 512
      %33 = vsyncadd [#allocation6], %s32
      %s34 = sshll.u32 [#allocation5], 4
      %s35 = int_to_ptr.vmem [resolvable:$true] %s34
      %40 = dma.hbm_to_vmem [thread:$0]  %s1, 512, %s35, [#allocation6], 64, 64, 4
    $region9: #{discriminator_forward.1} parent=1 // pred_fallthru
      _
    // Predicated region
    $region10: #{discriminator_forward.1} parent=1 // pred_check
      _
    $region11: #{discriminator_forward.1} parent=1 // pred_check_branch
      %42 = sbr.rel (0) target = $region13
    $region12: #{discriminator_forward.1} parent=1 // pred_region
      _
    $region13: #{discriminator_forward.1} parent=1 // pred_fallthru
      _
    // Predicated region
    $region14: #{discriminator_forward.1} parent=1 // pred_check
      _
    $region15: #{discriminator_forward.1} parent=1 // pred_check_branch
      %44 = sbr.rel (0) target = $region17
    $region16: #{discriminator_forward.1} parent=1 // pred_region
      %s46 = ssub.s32 2048, 2048
      %47 = vsyncadd [#allocation6], %s46
      %s48 = sshll.u32 [#allocation7], 4
      %s49 = int_to_ptr.vmem [resolvable:$true] %s48
      %54 = dma.hbm_to_vmem [thread:$0]  %s3, 2048, %s49, [#allocation6], 128, 128, 8
    $region17: #{discriminator_forward.1} parent=1 // pred_fallthru
      _
    // Predicated region
    $region18: #{discriminator_forward.1} parent=1 // pred_check
      _
    $region19: #{discriminator_forward.1} parent=1 // pred_check_branch
      %56 = sbr.rel (0) target = $region21
    $region20: #{discriminator_forward.1} parent=1 // pred_region
      %s58 = ssub.s32 32, 32
      %59 = vsyncadd [#allocation9], %s58
      %s61 = sshll.u32 [#allocation8], 4
      %s62 = int_to_ptr.vmem [resolvable:$true] %s61
      %64 = dma.hbm_to_vmem [thread:$0]  %s4, 32, %s62, [#allocation9]
    $region21: #{discriminator_forward.1} parent=1 // pred_fallthru
      _
    // Predicated region
    $region22: #{discriminator_forward.1} parent=1 // pred_check
      _
    $region23: #{discriminator_forward.1} parent=1 // pred_check_branch
      %66 = sbr.rel (0) target = $region25
    $region24: #{discriminator_forward.1} parent=1 // pred_region
      %s68 = ssub.s32 8192, 8192
      %69 = vsyncadd [#allocation9], %s68
      %s70 = sshll.u32 [#allocation10], 4
      %s71 = int_to_ptr.vmem [resolvable:$true] %s70
      %76 = dma.hbm_to_vmem [thread:$0]  %s5, 8192, %s71, [#allocation9], 256, 256, 16
    $region25: #{discriminator_forward.1} parent=1 // pred_fallthru
      _
    // Predicated region
    $region26: #{discriminator_forward.1} parent=1 // pred_check
      _
    $region27: #{discriminator_forward.1} parent=1 // pred_check_branch
      %78 = sbr.rel (0) target = $region29
    $region28: #{discriminator_forward.1} parent=1 // pred_region
      _
    $region29: #{discriminator_forward.1} parent=1 // pred_fallthru
      _
    // Predicated region
    $region30: #{discriminator_forward.1} parent=1 // pred_check
      _
    $region31: #{discriminator_forward.1} parent=1 // pred_check_branch
      %80 = sbr.rel (0) target = $region33
    $region32: #{discriminator_forward.1} parent=1 // pred_region
      _
    $region33: #{discriminator_forward.1} parent=1 // pred_fallthru
      _
    // Predicated region
    $region34: #{discriminator_forward.1} parent=1 // pred_check
      _
    $region35: #{discriminator_forward.1} parent=1 // pred_check_branch
      %82 = sbr.rel (0) target = $region37
    $region36: #{discriminator_forward.1} parent=1 // pred_region
      _
    $region37: #{discriminator_forward.1} parent=1 // pred_fallthru
      _
    // Predicated region
    $region38: #{discriminator_forward.1} parent=1 // pred_check
      _
    $region39: #{discriminator_forward.1} parent=1 // pred_check_branch
      %84 = sbr.rel (0) target = $region41
    $region40: #{discriminator_forward.1} parent=1 // pred_region
      %85 = dma.done [#allocation4], 128
    $region41: #{discriminator_forward.1} parent=1 // pred_fallthru
      _
    // Predicated region
    $region42: #{discriminator_forward.1} parent=1 // pred_check
      _
    $region43: #{discriminator_forward.1} parent=1 // pred_check_branch
      %87 = sbr.rel (0) target = $region45
    $region44: #{discriminator_forward.1} parent=1 // pred_region
      %88 = dma.done [#allocation6], 512
    $region45: #{discriminator_forward.1} parent=1 // pred_fallthru
      _
    // Predicated region
    $region46: #{discriminator_forward.1} parent=1 // pred_check
      _
    $region47: #{discriminator_forward.1} parent=1 // pred_check_branch
      %90 = sbr.rel (0) target = $region49
    $region48: #{discriminator_forward.1} parent=1 // pred_region
      %91 = dma.done [#allocation6], 2048
    $region49: #{discriminator_forward.1} parent=1 // pred_fallthru
      _
    // Predicated region
    $region50: #{discriminator_forward.1} parent=1 // pred_check
      _
    $region51: #{discriminator_forward.1} parent=1 // pred_check_branch
      %93 = sbr.rel (0) target = $region53
    $region52: #{discriminator_forward.1} parent=1 // pred_region
      %94 = dma.done [#allocation9], 32
    $region53: #{discriminator_forward.1} parent=1 // pred_fallthru
      _
    // Predicated region
    $region54: #{discriminator_forward.1} parent=1 // pred_check
      _
    $region55: #{discriminator_forward.1} parent=1 // pred_check_branch
      %96 = sbr.rel (0) target = $region57
    $region56: #{discriminator_forward.1} parent=1 // pred_region
      %97 = dma.done [#allocation9], 8192
    $region57: #{discriminator_forward.1} parent=1 // pred_fallthru
      _
    %v99 = vld [vmem:[#allocation3] sm:$0xff]
    %v100 = vpack.c.bf16 %v99, %v99
    %v101 = vld [vmem:[#allocation5] sm:$0xf]
    %v102 = vld [vmem:[#allocation5 + $0x4] sm:$0xf]
    %v103 = vld [vmem:[#allocation5 + $0x8] sm:$0xf]
    %v104 = vld [vmem:[#allocation5 + $0xc] sm:$0xf]
    %v105 = vld [vmem:[#allocation5 + $0x10] sm:$0xf]
    %v106 = vld [vmem:[#allocation5 + $0x14] sm:$0xf]
    %v107 = vld [vmem:[#allocation5 + $0x18] sm:$0xf]
    %v108 = vld [vmem:[#allocation5 + $0x1c] sm:$0xf]
    %v109 = vld [vmem:[%s2] sm:$0x1]
    %v111 = vlaneseq
    %v112 = vshrl.u32 %v111, 7
    %v113 = vsub.s32 0, %v112
    %v114 = vrot.slane %v109, %v113
    %v124 = vunpack.c.l.b16 %v101
    %v125 = vunpack.c.l.b16 %v102
    %v126 = vunpack.c.l.b16 %v103
    %v127 = vunpack.c.l.b16 %v104
    %v128 = vunpack.c.l.b16 %v105
    %v129 = vunpack.c.l.b16 %v106
    %v130 = vunpack.c.l.b16 %v107
    %v131 = vunpack.c.l.b16 %v108
    %v132 = vpack.c.b16 %v125, %v124
    %v133 = vpack.c.b16 %v127, %v126
    %v134 = vpack.c.b16 %v129, %v128
    %v135 = vpack.c.b16 %v131, %v130
    %vm140 = vcmask 523264
    %v142 = vsel %vm140, %v100, 0
    %144 = vmatprep.subr.bf16.mxu0 0
    %145 = vmatpush1.bf16.msra.mxu0 0
    %146 = vmatprep.subr.bf16.mxu0 0
    %147 = vmatpush1.bf16.msra.mxu0 0
    %148 = vmatprep.subr.bf16.mxu0 0
    %149 = vmatpush1.bf16.msra.mxu0 0
    %150 = vmatprep.subr.bf16.mxu0 0
    %151 = vmatpush1.bf16.msra.mxu0 0
    %152 = vmatprep.subr.bf16.mxu0 0
    %153 = vmatpush1.bf16.msra.mxu0 %v135
    %154 = vmatprep.subr.bf16.mxu0 0
    %155 = vmatpush1.bf16.msra.mxu0 %v134
    %156 = vmatprep.subr.bf16.mxu0 0
    %157 = vmatpush1.bf16.msra.mxu0 %v133
    %158 = vmatprep.subr.bf16.mxu0 0
    %159 = vmatpush1.bf16.msra.mxu0 %v132
    %160 = vmatprep.subr.bf16.mxu0 0
    %161 = vmatpush2.bf16.msra.mxu0 0
    %162 = vmatprep.subr.bf16.mxu0 0
    %163 = vmatpush2.bf16.msra.mxu0 0
    %164 = vmatprep.subr.bf16.mxu0 0
    %165 = vmatpush2.bf16.msra.mxu0 0
    %166 = vmatprep.subr.bf16.mxu0 0
    %167 = vmatpush2.bf16.msra.mxu0 0
    %168 = vmatprep.subr.bf16.mxu0 0
    %169 = vmatpush2.bf16.msra.mxu0 0
    %170 = vmatprep.subr.bf16.mxu0 0
    %171 = vmatpush2.bf16.msra.mxu0 0
    %172 = vmatprep.subr.bf16.mxu0 0
    %173 = vmatpush2.bf16.msra.mxu0 0
    %174 = vmatprep.subr.bf16.mxu0 0
    %175 = vmatpush2.bf16.msra.mxu0 0
    %176 = vmatprep.mubr.bf16.mxu0 0
    %177 = vmatmul.mubr.bf16.gmra.mxu0 %v142
    %v178 = vpop.f32.mrf.mxu0
    %v179 = vadd.f32 %v114, %v178
    %v180 = vpop.f32.mrf.mxu0
    %v181 = vpop.f32.mrf.mxu0
    %v182 = vpop.f32.mrf.mxu0
    %183 = vdwg.mxu0
    %vm184 = vcmp.gt.f32.partialorder %v179, 0.0
    %v185 = vmul.f32 %v179, 0.1
    %v186 = vsel %vm184, %v179, %v185
    %v187 = vpack.c.bf16 %v186, %v186
    %v188 = vld [vmem:[#allocation7] sm:$0xff]
    %v189 = vld [vmem:[#allocation7 + $0x8] sm:$0xff]
    %v190 = vld [vmem:[#allocation7 + $0x10] sm:$0xff]
    %v191 = vld [vmem:[#allocation7 + $0x18] sm:$0xff]
    %v192 = vld [vmem:[#allocation7 + $0x20] sm:$0xff]
    %v193 = vld [vmem:[#allocation7 + $0x28] sm:$0xff]
    %v194 = vld [vmem:[#allocation7 + $0x30] sm:$0xff]
    %v195 = vld [vmem:[#allocation7 + $0x38] sm:$0xff]
    %v196 = vld [vmem:[#allocation7 + $0x40] sm:$0xff]
    %v197 = vld [vmem:[#allocation7 + $0x48] sm:$0xff]
    %v198 = vld [vmem:[#allocation7 + $0x50] sm:$0xff]
    %v199 = vld [vmem:[#allocation7 + $0x58] sm:$0xff]
    %v200 = vld [vmem:[#allocation7 + $0x60] sm:$0xff]
    %v201 = vld [vmem:[#allocation7 + $0x68] sm:$0xff]
    %v202 = vld [vmem:[#allocation7 + $0x70] sm:$0xff]
    %v203 = vld [vmem:[#allocation7 + $0x78] sm:$0xff]
    %v204 = vld [vmem:[#allocation8] sm:$0x3]
    %v206 = vlaneseq
    %v207 = vshrl.u32 %v206, 7
    %v208 = vsub.s32 0, %v207
    %v209 = vrot.slane %v204, %v208
    %v210 = vlaneseq
    %v211 = vshrl.u32 %v210, 7
    %v212 = vsub.s32 1, %v211
    %v213 = vrot.slane %v204, %v212
    %v232 = vunpack.c.l.b16 %v188
    %v233 = vunpack.c.h.b16 %v188
    %v234 = vunpack.c.l.b16 %v189
    %v235 = vunpack.c.h.b16 %v189
    %v236 = vunpack.c.l.b16 %v190
    %v237 = vunpack.c.h.b16 %v190
    %v238 = vunpack.c.l.b16 %v191
    %v239 = vunpack.c.h.b16 %v191
    %v240 = vunpack.c.l.b16 %v192
    %v241 = vunpack.c.h.b16 %v192
    %v242 = vunpack.c.l.b16 %v193
    %v243 = vunpack.c.h.b16 %v193
    %v244 = vunpack.c.l.b16 %v194
    %v245 = vunpack.c.h.b16 %v194
    %v246 = vunpack.c.l.b16 %v195
    %v247 = vunpack.c.h.b16 %v195
    %v248 = vunpack.c.l.b16 %v196
    %v249 = vunpack.c.h.b16 %v196
    %v250 = vunpack.c.l.b16 %v197
    %v251 = vunpack.c.h.b16 %v197
    %v252 = vunpack.c.l.b16 %v198
    %v253 = vunpack.c.h.b16 %v198
    %v254 = vunpack.c.l.b16 %v199
    %v255 = vunpack.c.h.b16 %v199
    %v256 = vunpack.c.l.b16 %v200
    %v257 = vunpack.c.h.b16 %v200
    %v258 = vunpack.c.l.b16 %v201
    %v259 = vunpack.c.h.b16 %v201
    %v260 = vunpack.c.l.b16 %v202
    %v261 = vunpack.c.h.b16 %v202
    %v262 = vunpack.c.l.b16 %v203
    %v263 = vunpack.c.h.b16 %v203
    %v264 = vpack.c.b16 %v234, %v232
    %v265 = vpack.c.b16 %v235, %v233
    %v266 = vpack.c.b16 %v238, %v236
    %v267 = vpack.c.b16 %v239, %v237
    %v268 = vpack.c.b16 %v242, %v240
    %v269 = vpack.c.b16 %v243, %v241
    %v270 = vpack.c.b16 %v246, %v244
    %v271 = vpack.c.b16 %v247, %v245
    %v272 = vpack.c.b16 %v250, %v248
    %v273 = vpack.c.b16 %v251, %v249
    %v274 = vpack.c.b16 %v254, %v252
    %v275 = vpack.c.b16 %v255, %v253
    %v276 = vpack.c.b16 %v258, %v256
    %v277 = vpack.c.b16 %v259, %v257
    %v278 = vpack.c.b16 %v262, %v260
    %v279 = vpack.c.b16 %v263, %v261
    %296 = vmatprep.subr.bf16.mxu0 %v279
    %297 = vmatpush1.bf16.msra.mxu0 %v278
    %298 = vmatprep.subr.bf16.mxu0 %v277
    %299 = vmatpush1.bf16.msra.mxu0 %v276
    %300 = vmatprep.subr.bf16.mxu0 %v275
    %301 = vmatpush1.bf16.msra.mxu0 %v274
    %302 = vmatprep.subr.bf16.mxu0 %v273
    %303 = vmatpush1.bf16.msra.mxu0 %v272
    %304 = vmatprep.subr.bf16.mxu0 %v271
    %305 = vmatpush1.bf16.msra.mxu0 %v270
    %306 = vmatprep.subr.bf16.mxu0 %v269
    %307 = vmatpush1.bf16.msra.mxu0 %v268
    %308 = vmatprep.subr.bf16.mxu0 %v267
    %309 = vmatpush1.bf16.msra.mxu0 %v266
    %310 = vmatprep.subr.bf16.mxu0 %v265
    %311 = vmatpush1.bf16.msra.mxu0 %v264
    %312 = vmatprep.subr.bf16.mxu0 0
    %313 = vmatpush2.bf16.msra.mxu0 0
    %314 = vmatprep.subr.bf16.mxu0 0
    %315 = vmatpush2.bf16.msra.mxu0 0
    %316 = vmatprep.subr.bf16.mxu0 0
    %317 = vmatpush2.bf16.msra.mxu0 0
    %318 = vmatprep.subr.bf16.mxu0 0
    %319 = vmatpush2.bf16.msra.mxu0 0
    %320 = vmatprep.subr.bf16.mxu0 0
    %321 = vmatpush2.bf16.msra.mxu0 0
    %322 = vmatprep.subr.bf16.mxu0 0
    %323 = vmatpush2.bf16.msra.mxu0 0
    %324 = vmatprep.subr.bf16.mxu0 0
    %325 = vmatpush2.bf16.msra.mxu0 0
    %326 = vmatprep.subr.bf16.mxu0 0
    %327 = vmatpush2.bf16.msra.mxu0 0
    %328 = vmatprep.mubr.bf16.mxu0 0
    %329 = vmatmul.mubr.bf16.gmra.mxu0 %v187
    %v330 = vpop.f32.mrf.mxu0
    %v331 = vadd.f32 %v209, %v330
    %v332 = vpop.f32.mrf.mxu0
    %v333 = vadd.f32 %v213, %v332
    %v334 = vpop.f32.mrf.mxu0
    %v335 = vpop.f32.mrf.mxu0
    %336 = vdwg.mxu0
    %vm337 = vcmp.gt.f32.partialorder %v331, 0.0
    %vm338 = vcmp.gt.f32.partialorder %v333, 0.0
    %v339 = vmul.f32 %v331, 0.1
    %v340 = vmul.f32 %v333, 0.1
    %v341 = vsel %vm337, %v331, %v339
    %v342 = vsel %vm338, %v333, %v340
    %v343 = vpack.c.bf16 %v341, %v341
    %v344 = vpack.c.bf16 %v342, %v342
    %v345 = vld [vmem:[#allocation10] sm:$0xff]
    %v346 = vld [vmem:[#allocation10 + $0x8] sm:$0xff]
    %v347 = vld [vmem:[#allocation10 + $0x10] sm:$0xff]
    %v348 = vld [vmem:[#allocation10 + $0x18] sm:$0xff]
    %v349 = vld [vmem:[#allocation10 + $0x20] sm:$0xff]
    %v350 = vld [vmem:[#allocation10 + $0x28] sm:$0xff]
    %v351 = vld [vmem:[#allocation10 + $0x30] sm:$0xff]
    %v352 = vld [vmem:[#allocation10 + $0x38] sm:$0xff]
    %v353 = vld [vmem:[#allocation10 + $0x40] sm:$0xff]
    %v354 = vld [vmem:[#allocation10 + $0x48] sm:$0xff]
    %v355 = vld [vmem:[#allocation10 + $0x50] sm:$0xff]
    %v356 = vld [vmem:[#allocation10 + $0x58] sm:$0xff]
    %v357 = vld [vmem:[#allocation10 + $0x60] sm:$0xff]
    %v358 = vld [vmem:[#allocation10 + $0x68] sm:$0xff]
    %v359 = vld [vmem:[#allocation10 + $0x70] sm:$0xff]
    %v360 = vld [vmem:[#allocation10 + $0x78] sm:$0xff]
    %v361 = vld [vmem:[#allocation10 + $0x80] sm:$0xff]
    %v362 = vld [vmem:[#allocation10 + $0x88] sm:$0xff]
    %v363 = vld [vmem:[#allocation10 + $0x90] sm:$0xff]
    %v364 = vld [vmem:[#allocation10 + $0x98] sm:$0xff]
    %v365 = vld [vmem:[#allocation10 + $0xa0] sm:$0xff]
    %v366 = vld [vmem:[#allocation10 + $0xa8] sm:$0xff]
    %v367 = vld [vmem:[#allocation10 + $0xb0] sm:$0xff]
    %v368 = vld [vmem:[#allocation10 + $0xb8] sm:$0xff]
    %v369 = vld [vmem:[#allocation10 + $0xc0] sm:$0xff]
    %v370 = vld [vmem:[#allocation10 + $0xc8] sm:$0xff]
    %v371 = vld [vmem:[#allocation10 + $0xd0] sm:$0xff]
    %v372 = vld [vmem:[#allocation10 + $0xd8] sm:$0xff]
    %v373 = vld [vmem:[#allocation10 + $0xe0] sm:$0xff]
    %v374 = vld [vmem:[#allocation10 + $0xe8] sm:$0xff]
    %v375 = vld [vmem:[#allocation10 + $0xf0] sm:$0xff]
    %v376 = vld [vmem:[#allocation10 + $0xf8] sm:$0xff]
    %v377 = vld [vmem:[#allocation10 + $0x100] sm:$0xff]
    %v378 = vld [vmem:[#allocation10 + $0x108] sm:$0xff]
    %v379 = vld [vmem:[#allocation10 + $0x110] sm:$0xff]
    %v380 = vld [vmem:[#allocation10 + $0x118] sm:$0xff]
    %v381 = vld [vmem:[#allocation10 + $0x120] sm:$0xff]
    %v382 = vld [vmem:[#allocation10 + $0x128] sm:$0xff]
    %v383 = vld [vmem:[#allocation10 + $0x130] sm:$0xff]
    %v384 = vld [vmem:[#allocation10 + $0x138] sm:$0xff]
    %v385 = vld [vmem:[#allocation10 + $0x140] sm:$0xff]
    %v386 = vld [vmem:[#allocation10 + $0x148] sm:$0xff]
    %v387 = vld [vmem:[#allocation10 + $0x150] sm:$0xff]
    %v388 = vld [vmem:[#allocation10 + $0x158] sm:$0xff]
    %v389 = vld [vmem:[#allocation10 + $0x160] sm:$0xff]
    %v390 = vld [vmem:[#allocation10 + $0x168] sm:$0xff]
    %v391 = vld [vmem:[#allocation10 + $0x170] sm:$0xff]
    %v392 = vld [vmem:[#allocation10 + $0x178] sm:$0xff]
    %v393 = vld [vmem:[#allocation10 + $0x180] sm:$0xff]
    %v394 = vld [vmem:[#allocation10 + $0x188] sm:$0xff]
    %v395 = vld [vmem:[#allocation10 + $0x190] sm:$0xff]
    %v396 = vld [vmem:[#allocation10 + $0x198] sm:$0xff]
    %v397 = vld [vmem:[#allocation10 + $0x1a0] sm:$0xff]
    %v398 = vld [vmem:[#allocation10 + $0x1a8] sm:$0xff]
    %v399 = vld [vmem:[#allocation10 + $0x1b0] sm:$0xff]
    %v400 = vld [vmem:[#allocation10 + $0x1b8] sm:$0xff]
    %v401 = vld [vmem:[#allocation10 + $0x1c0] sm:$0xff]
    %v402 = vld [vmem:[#allocation10 + $0x1c8] sm:$0xff]
    %v403 = vld [vmem:[#allocation10 + $0x1d0] sm:$0xff]
    %v404 = vld [vmem:[#allocation10 + $0x1d8] sm:$0xff]
    %v405 = vld [vmem:[#allocation10 + $0x1e0] sm:$0xff]
    %v406 = vld [vmem:[#allocation10 + $0x1e8] sm:$0xff]
    %v407 = vld [vmem:[#allocation10 + $0x1f0] sm:$0xff]
    %v408 = vld [vmem:[#allocation10 + $0x1f8] sm:$0xff]
    %v409 = vld [vmem:[%s6] sm:$0xf]
    %v411 = vlaneseq
    %v412 = vshrl.u32 %v411, 7
    %v413 = vsub.s32 0, %v412
    %v414 = vrot.slane %v409, %v413
    %v415 = vlaneseq
    %v416 = vshrl.u32 %v415, 7
    %v417 = vsub.s32 1, %v416
    %v418 = vrot.slane %v409, %v417
    %v419 = vlaneseq
    %v420 = vshrl.u32 %v419, 7
    %v421 = vsub.s32 2, %v420
    %v422 = vrot.slane %v409, %v421
    %v423 = vlaneseq
    %v424 = vshrl.u32 %v423, 7
    %v425 = vsub.s32 3, %v424
    %v426 = vrot.slane %v409, %v425
    %v495 = vunpack.c.l.b16 %v345
    %v496 = vunpack.c.h.b16 %v345
    %v497 = vunpack.c.l.b16 %v346
    %v498 = vunpack.c.h.b16 %v346
    %v499 = vunpack.c.l.b16 %v347
    %v500 = vunpack.c.h.b16 %v347
    %v501 = vunpack.c.l.b16 %v348
    %v502 = vunpack.c.h.b16 %v348
    %v503 = vunpack.c.l.b16 %v349
    %v504 = vunpack.c.h.b16 %v349
    %v505 = vunpack.c.l.b16 %v350
    %v506 = vunpack.c.h.b16 %v350
    %v507 = vunpack.c.l.b16 %v351
    %v508 = vunpack.c.h.b16 %v351
    %v509 = vunpack.c.l.b16 %v352
    %v510 = vunpack.c.h.b16 %v352
    %v511 = vunpack.c.l.b16 %v353
    %v512 = vunpack.c.h.b16 %v353
    %v513 = vunpack.c.l.b16 %v354
    %v514 = vunpack.c.h.b16 %v354
    %v515 = vunpack.c.l.b16 %v355
    %v516 = vunpack.c.h.b16 %v355
    %v517 = vunpack.c.l.b16 %v356
    %v518 = vunpack.c.h.b16 %v356
    %v519 = vunpack.c.l.b16 %v357
    %v520 = vunpack.c.h.b16 %v357
    %v521 = vunpack.c.l.b16 %v358
    %v522 = vunpack.c.h.b16 %v358
    %v523 = vunpack.c.l.b16 %v359
    %v524 = vunpack.c.h.b16 %v359
    %v525 = vunpack.c.l.b16 %v360
    %v526 = vunpack.c.h.b16 %v360
    %v527 = vunpack.c.l.b16 %v361
    %v528 = vunpack.c.h.b16 %v361
    %v529 = vunpack.c.l.b16 %v362
    %v530 = vunpack.c.h.b16 %v362
    %v531 = vunpack.c.l.b16 %v363
    %v532 = vunpack.c.h.b16 %v363
    %v533 = vunpack.c.l.b16 %v364
    %v534 = vunpack.c.h.b16 %v364
    %v535 = vunpack.c.l.b16 %v365
    %v536 = vunpack.c.h.b16 %v365
    %v537 = vunpack.c.l.b16 %v366
    %v538 = vunpack.c.h.b16 %v366
    %v539 = vunpack.c.l.b16 %v367
    %v540 = vunpack.c.h.b16 %v367
    %v541 = vunpack.c.l.b16 %v368
    %v542 = vunpack.c.h.b16 %v368
    %v543 = vunpack.c.l.b16 %v369
    %v544 = vunpack.c.h.b16 %v369
    %v545 = vunpack.c.l.b16 %v370
    %v546 = vunpack.c.h.b16 %v370
    %v547 = vunpack.c.l.b16 %v371
    %v548 = vunpack.c.h.b16 %v371
    %v549 = vunpack.c.l.b16 %v372
    %v550 = vunpack.c.h.b16 %v372
    %v551 = vunpack.c.l.b16 %v373
    %v552 = vunpack.c.h.b16 %v373
    %v553 = vunpack.c.l.b16 %v374
    %v554 = vunpack.c.h.b16 %v374
    %v555 = vunpack.c.l.b16 %v375
    %v556 = vunpack.c.h.b16 %v375
    %v557 = vunpack.c.l.b16 %v376
    %v558 = vunpack.c.h.b16 %v376
    %v559 = vunpack.c.l.b16 %v377
    %v560 = vunpack.c.h.b16 %v377
    %v561 = vunpack.c.l.b16 %v378
    %v562 = vunpack.c.h.b16 %v378
    %v563 = vunpack.c.l.b16 %v379
    %v564 = vunpack.c.h.b16 %v379
    %v565 = vunpack.c.l.b16 %v380
    %v566 = vunpack.c.h.b16 %v380
    %v567 = vunpack.c.l.b16 %v381
    %v568 = vunpack.c.h.b16 %v381
    %v569 = vunpack.c.l.b16 %v382
    %v570 = vunpack.c.h.b16 %v382
    %v571 = vunpack.c.l.b16 %v383
    %v572 = vunpack.c.h.b16 %v383
    %v573 = vunpack.c.l.b16 %v384
    %v574 = vunpack.c.h.b16 %v384
    %v575 = vunpack.c.l.b16 %v385
    %v576 = vunpack.c.h.b16 %v385
    %v577 = vunpack.c.l.b16 %v386
    %v578 = vunpack.c.h.b16 %v386
    %v579 = vunpack.c.l.b16 %v387
    %v580 = vunpack.c.h.b16 %v387
    %v581 = vunpack.c.l.b16 %v388
    %v582 = vunpack.c.h.b16 %v388
    %v583 = vunpack.c.l.b16 %v389
    %v584 = vunpack.c.h.b16 %v389
    %v585 = vunpack.c.l.b16 %v390
    %v586 = vunpack.c.h.b16 %v390
    %v587 = vunpack.c.l.b16 %v391
    %v588 = vunpack.c.h.b16 %v391
    %v589 = vunpack.c.l.b16 %v392
    %v590 = vunpack.c.h.b16 %v392
    %v591 = vunpack.c.l.b16 %v393
    %v592 = vunpack.c.h.b16 %v393
    %v593 = vunpack.c.l.b16 %v394
    %v594 = vunpack.c.h.b16 %v394
    %v595 = vunpack.c.l.b16 %v395
    %v596 = vunpack.c.h.b16 %v395
    %v597 = vunpack.c.l.b16 %v396
    %v598 = vunpack.c.h.b16 %v396
    %v599 = vunpack.c.l.b16 %v397
    %v600 = vunpack.c.h.b16 %v397
    %v601 = vunpack.c.l.b16 %v398
    %v602 = vunpack.c.h.b16 %v398
    %v603 = vunpack.c.l.b16 %v399
    %v604 = vunpack.c.h.b16 %v399
    %v605 = vunpack.c.l.b16 %v400
    %v606 = vunpack.c.h.b16 %v400
    %v607 = vunpack.c.l.b16 %v401
    %v608 = vunpack.c.h.b16 %v401
    %v609 = vunpack.c.l.b16 %v402
    %v610 = vunpack.c.h.b16 %v402
    %v611 = vunpack.c.l.b16 %v403
    %v612 = vunpack.c.h.b16 %v403
    %v613 = vunpack.c.l.b16 %v404
    %v614 = vunpack.c.h.b16 %v404
    %v615 = vunpack.c.l.b16 %v405
    %v616 = vunpack.c.h.b16 %v405
    %v617 = vunpack.c.l.b16 %v406
    %v618 = vunpack.c.h.b16 %v406
    %v619 = vunpack.c.l.b16 %v407
    %v620 = vunpack.c.h.b16 %v407
    %v621 = vunpack.c.l.b16 %v408
    %v622 = vunpack.c.h.b16 %v408
    %v623 = vpack.c.b16 %v499, %v495
    %v624 = vpack.c.b16 %v500, %v496
    %v625 = vpack.c.b16 %v501, %v497
    %v626 = vpack.c.b16 %v502, %v498
    %v627 = vpack.c.b16 %v507, %v503
    %v628 = vpack.c.b16 %v508, %v504
    %v629 = vpack.c.b16 %v509, %v505
    %v630 = vpack.c.b16 %v510, %v506
    %v631 = vpack.c.b16 %v515, %v511
    %v632 = vpack.c.b16 %v516, %v512
    %v633 = vpack.c.b16 %v517, %v513
    %v634 = vpack.c.b16 %v518, %v514
    %v635 = vpack.c.b16 %v523, %v519
    %v636 = vpack.c.b16 %v524, %v520
    %v637 = vpack.c.b16 %v525, %v521
    %v638 = vpack.c.b16 %v526, %v522
    %v639 = vpack.c.b16 %v531, %v527
    %v640 = vpack.c.b16 %v532, %v528
    %v641 = vpack.c.b16 %v533, %v529
    %v642 = vpack.c.b16 %v534, %v530
    %v643 = vpack.c.b16 %v539, %v535
    %v644 = vpack.c.b16 %v540, %v536
    %v645 = vpack.c.b16 %v541, %v537
    %v646 = vpack.c.b16 %v542, %v538
    %v647 = vpack.c.b16 %v547, %v543
    %v648 = vpack.c.b16 %v548, %v544
    %v649 = vpack.c.b16 %v549, %v545
    %v650 = vpack.c.b16 %v550, %v546
    %v651 = vpack.c.b16 %v555, %v551
    %v652 = vpack.c.b16 %v556, %v552
    %v653 = vpack.c.b16 %v557, %v553
    %v654 = vpack.c.b16 %v558, %v554
    %v655 = vpack.c.b16 %v563, %v559
    %v656 = vpack.c.b16 %v564, %v560
    %v657 = vpack.c.b16 %v565, %v561
    %v658 = vpack.c.b16 %v566, %v562
    %v659 = vpack.c.b16 %v571, %v567
    %v660 = vpack.c.b16 %v572, %v568
    %v661 = vpack.c.b16 %v573, %v569
    %v662 = vpack.c.b16 %v574, %v570
    %v663 = vpack.c.b16 %v579, %v575
    %v664 = vpack.c.b16 %v580, %v576
    %v665 = vpack.c.b16 %v581, %v577
    %v666 = vpack.c.b16 %v582, %v578
    %v667 = vpack.c.b16 %v587, %v583
    %v668 = vpack.c.b16 %v588, %v584
    %v669 = vpack.c.b16 %v589, %v585
    %v670 = vpack.c.b16 %v590, %v586
    %v671 = vpack.c.b16 %v595, %v591
    %v672 = vpack.c.b16 %v596, %v592
    %v673 = vpack.c.b16 %v597, %v593
    %v674 = vpack.c.b16 %v598, %v594
    %v675 = vpack.c.b16 %v603, %v599
    %v676 = vpack.c.b16 %v604, %v600
    %v677 = vpack.c.b16 %v605, %v601
    %v678 = vpack.c.b16 %v606, %v602
    %v679 = vpack.c.b16 %v611, %v607
    %v680 = vpack.c.b16 %v612, %v608
    %v681 = vpack.c.b16 %v613, %v609
    %v682 = vpack.c.b16 %v614, %v610
    %v683 = vpack.c.b16 %v619, %v615
    %v684 = vpack.c.b16 %v620, %v616
    %v685 = vpack.c.b16 %v621, %v617
    %v686 = vpack.c.b16 %v622, %v618
    %751 = vmatprep.subr.bf16.mxu0 %v652
    %752 = vmatpush1.bf16.msra.mxu0 %v651
    %753 = vmatprep.subr.bf16.mxu0 %v648
    %754 = vmatpush1.bf16.msra.mxu0 %v647
    %755 = vmatprep.subr.bf16.mxu0 %v644
    %756 = vmatpush1.bf16.msra.mxu0 %v643
    %757 = vmatprep.subr.bf16.mxu0 %v640
    %758 = vmatpush1.bf16.msra.mxu0 %v639
    %759 = vmatprep.subr.bf16.mxu0 %v636
    %760 = vmatpush1.bf16.msra.mxu0 %v635
    %761 = vmatprep.subr.bf16.mxu0 %v632
    %762 = vmatpush1.bf16.msra.mxu0 %v631
    %763 = vmatprep.subr.bf16.mxu0 %v628
    %764 = vmatpush1.bf16.msra.mxu0 %v627
    %765 = vmatprep.subr.bf16.mxu0 %v624
    %766 = vmatpush1.bf16.msra.mxu0 %v623
    %767 = vmatprep.subr.bf16.mxu0 %v684
    %768 = vmatpush2.bf16.msra.mxu0 %v683
    %769 = vmatprep.subr.bf16.mxu0 %v680
    %770 = vmatpush2.bf16.msra.mxu0 %v679
    %771 = vmatprep.subr.bf16.mxu0 %v676
    %772 = vmatpush2.bf16.msra.mxu0 %v675
    %773 = vmatprep.subr.bf16.mxu0 %v672
    %774 = vmatpush2.bf16.msra.mxu0 %v671
    %775 = vmatprep.subr.bf16.mxu0 %v668
    %776 = vmatpush2.bf16.msra.mxu0 %v667
    %777 = vmatprep.subr.bf16.mxu0 %v664
    %778 = vmatpush2.bf16.msra.mxu0 %v663
    %779 = vmatprep.subr.bf16.mxu0 %v660
    %780 = vmatpush2.bf16.msra.mxu0 %v659
    %781 = vmatprep.subr.bf16.mxu0 %v656
    %782 = vmatpush2.bf16.msra.mxu0 %v655
    %783 = vmatprep.mubr.bf16.mxu0 %v344
    %784 = vmatmul.mubr.bf16.gmra.mxu0 %v343
    %v785 = vpop.f32.mrf.mxu0
    %v786 = vadd.f32 %v414, %v785
    %v787 = vpop.f32.mrf.mxu0
    %v788 = vadd.f32 %v418, %v787
    %v789 = vpop.f32.mrf.mxu0
    %v790 = vpop.f32.mrf.mxu0
    %791 = vdwg.mxu0
    %792 = vmatprep.subr.bf16.mxu0 %v654
    %793 = vmatpush1.bf16.msra.mxu0 %v653
    %794 = vmatprep.subr.bf16.mxu0 %v650
    %795 = vmatpush1.bf16.msra.mxu0 %v649
    %796 = vmatprep.subr.bf16.mxu0 %v646
    %797 = vmatpush1.bf16.msra.mxu0 %v645
    %798 = vmatprep.subr.bf16.mxu0 %v642
    %799 = vmatpush1.bf16.msra.mxu0 %v641
    %800 = vmatprep.subr.bf16.mxu0 %v638
    %801 = vmatpush1.bf16.msra.mxu0 %v637
    %802 = vmatprep.subr.bf16.mxu0 %v634
    %803 = vmatpush1.bf16.msra.mxu0 %v633
    %804 = vmatprep.subr.bf16.mxu0 %v630
    %805 = vmatpush1.bf16.msra.mxu0 %v629
    %806 = vmatprep.subr.bf16.mxu0 %v626
    %807 = vmatpush1.bf16.msra.mxu0 %v625
    %808 = vmatprep.subr.bf16.mxu0 %v686
    %809 = vmatpush2.bf16.msra.mxu0 %v685
    %810 = vmatprep.subr.bf16.mxu0 %v682
    %811 = vmatpush2.bf16.msra.mxu0 %v681
    %812 = vmatprep.subr.bf16.mxu0 %v678
    %813 = vmatpush2.bf16.msra.mxu0 %v677
    %814 = vmatprep.subr.bf16.mxu0 %v674
    %815 = vmatpush2.bf16.msra.mxu0 %v673
    %816 = vmatprep.subr.bf16.mxu0 %v670
    %817 = vmatpush2.bf16.msra.mxu0 %v669
    %818 = vmatprep.subr.bf16.mxu0 %v666
    %819 = vmatpush2.bf16.msra.mxu0 %v665
    %820 = vmatprep.subr.bf16.mxu0 %v662
    %821 = vmatpush2.bf16.msra.mxu0 %v661
    %822 = vmatprep.subr.bf16.mxu0 %v658
    %823 = vmatpush2.bf16.msra.mxu0 %v657
    %824 = vmatprep.mubr.bf16.mxu0 %v344
    %825 = vmatmul.mubr.bf16.gmra.mxu0 %v343
    %v826 = vpop.f32.mrf.mxu0
    %v827 = vadd.f32 %v422, %v826
    %v828 = vpop.f32.mrf.mxu0
    %v829 = vadd.f32 %v426, %v828
    %v830 = vpop.f32.mrf.mxu0
    %v831 = vpop.f32.mrf.mxu0
    %832 = vdwg.mxu0
    %vm833 = vcmp.gt.f32.partialorder %v786, 0.0
    %vm834 = vcmp.gt.f32.partialorder %v788, 0.0
    %vm835 = vcmp.gt.f32.partialorder %v827, 0.0
    %vm836 = vcmp.gt.f32.partialorder %v829, 0.0
    %v837 = vmul.f32 %v786, 0.1
    %v838 = vmul.f32 %v788, 0.1
    %v839 = vmul.f32 %v827, 0.1
    %v840 = vmul.f32 %v829, 0.1
    %v841 = vsel %vm833, %v786, %v837
    %v842 = vsel %vm834, %v788, %v838
    %v843 = vsel %vm835, %v827, %v839
    %v844 = vsel %vm836, %v829, %v840
    %v845 = vld [vmem:[%s7] sm:$0xf]
    %v847 = vlaneseq
    %v848 = vshrl.u32 %v847, 7
    %v849 = vsub.s32 0, %v848
    %v850 = vrot.slane %v845, %v849
    %v851 = vlaneseq
    %v852 = vshrl.u32 %v851, 7
    %v853 = vsub.s32 1, %v852
    %v854 = vrot.slane %v845, %v853
    %v855 = vlaneseq
    %v856 = vshrl.u32 %v855, 7
    %v857 = vsub.s32 2, %v856
    %v858 = vrot.slane %v845, %v857
    %v859 = vlaneseq
    %v860 = vshrl.u32 %v859, 7
    %v861 = vsub.s32 3, %v860
    %v862 = vrot.slane %v845, %v861
    %v867 = vmul.f32 %v841, %v850
    %v868 = vmul.f32 %v842, %v854
    %v869 = vmul.f32 %v843, %v858
    %v870 = vmul.f32 %v844, %v862
    %v871 = vadd.f32 %v867, %v868
    %v872 = vadd.f32 %v871, %v869
    %v873 = vadd.f32 %v872, %v870
    %874 = vadd.xlane.f32.xlu0 %v873
    %v875 = vpop.xlane.xlu0 %874
    %v876 = vld [vmem:[#allocation2] sm:$0x1]
    %v878 = vlaneseq
    %v879 = vshrl.u32 %v878, 7
    %v880 = vsub.s32 0, %v879
    %v881 = vrot.slane %v876, %v880
    %v883 = vadd.f32 %v875, %v881
    %v884 = vxor.u32 %v883, 2147483648
    %v885 = vmul.f32 %v884, 1.442695
    %v886 = vpow.pop %v885
    %v887 = vadd.f32 %v886, 1.0
    %v888 = vrcp.pop %v887
    %v889 = vmul.f32 1.0, %v888
    %vm890 = vcmask 7168
    %891 = vst.msk [vmem:[%s9] sm:$0xff] %vm890, %v889
    // Predicated region
    $region58: #{discriminator_forward.1} parent=1 // pred_check
      _
    $region59: #{discriminator_forward.1} parent=1 // pred_check_branch
      %893 = sbr.rel (0) target = $region61
    $region60: #{discriminator_forward.1} parent=1 // pred_region
      _
    $region61: #{discriminator_forward.1} parent=1 // pred_fallthru
      _
    // Predicated region
    $region62: #{discriminator_forward.1} parent=1 // pred_check
      _
    $region63: #{discriminator_forward.1} parent=1 // pred_check_branch
      %895 = sbr.rel (0) target = $region65
    $region64: #{discriminator_forward.1} parent=1 // pred_region
      _
    $region65: #{discriminator_forward.1} parent=1 // pred_fallthru
      _
    %896 = vsyncpa [#allocation4], 1
    %897 = vsyncpa [#allocation6], 1
    %898 = vsyncpa [#allocation9], 1

</llo_original>
